<compile_context>
chip_gen: v7x
topology: tpu7x:2x2x1
jax: 0.10.0
libtpu: 0.0.40
codegen_flags: <defaults>
</compile_context>

<pallas_src>
import jax
import jax.numpy as jnp
import numpy as np
from jax.experimental import pallas as pl
from jax.experimental.pallas import tpu as pltpu


def _ptm_kernel(x_ref, wb_ref, out_ref):
    f32 = jnp.float32
    n4 = x_ref.shape[1]            # 4 * n_states
    n = n4 // 4
    x = x_ref[...].astype(f32)     # (B, 4N) = [a | bp | cp | dp]

    def stage(v, s):
        # One full-width matmul per stage: the zero rows of the slab pick out
        # the live input band of `v`; the last slab row is the band-placed bias.
        wb = wb_ref[s]             # (4N+1, 4N)
        return (jnp.dot(v, wb[:n4, :], preferred_element_type=f32)
                + wb[n4:n4 + 1, :])

    # ---- stage 1: b posteriors (band N:2N) --------------------------------
    #   u b-band: ab(a)*bp     u c-band: ac(a)*cp     u d-band: ad(a)*dp
    u = stage(x, 0) * x
    inv_b = 1.0 / jnp.sum(u[:, n:2 * n])

    # ---- stage 2: c posteriors (band 2N:3N) -------------------------------
    # Full-width u*inv_b feeds the matmul; slab[1]'s zero rows select exactly
    # the normalized b band, so no LHS slicing / lane realignment is needed.
    #   v c-band: ac(a)*bc(b)*cp     v d-band: ad(a)*bd(b)*dp
    v = stage(u * inv_b, 1) * u
    inv_c = 1.0 / jnp.sum(v[:, 2 * n:3 * n])

    # ---- stage 3: d posteriors (band 3N:4N) -------------------------------
    #   w d-band: ad(a)*bd(b)*cd(c)*dp
    w = stage(v * inv_c, 2) * v
    inv_d = 1.0 / jnp.sum(w[:, 3 * n:4 * n])

    # Emit the torch.cat((a, b, c, d), dim=1) layout directly (4N lanes fit in
    # a single vreg; static lane-sliced stores, no wrapper-side transpose).
    dt = out_ref.dtype
    out_ref[:, 0:n] = x[:, 0:n].astype(dt)
    out_ref[:, n:2 * n] = (u[:, n:2 * n] * inv_b).astype(dt)
    out_ref[:, 2 * n:3 * n] = (v[:, 2 * n:3 * n] * inv_c).astype(dt)
    out_ref[:, 3 * n:4 * n] = (w[:, 3 * n:4 * n] * inv_d).astype(dt)


def pack_params(params, n_states):
    """One-time parameter packing (at init, not per forward call).

    params: dict 'ab','ac','ad','bc','bd','cd' -> (W, bias) with PyTorch
            nn.Linear layout W = (out_features, in_features), bias = (N,).
    Returns:
      wb_slab (3, 4N+1, 4N) float32
        stage s rows 0:4N  = lane-band-aligned, zero-padded W^T
        stage s row  4N    = lane-band-aligned bias
      Lane bands: a = 0:N, b = N:2N, c = 2N:3N, d = 3N:4N.
    """
    n = n_states
    n4 = 4 * n
    slab = np.zeros((3, n4 + 1, n4), np.float32)

    def put(stage, in_band, out_band, name):
        w, bias = params[name]
        w = np.asarray(w, np.float32)          # (out, in) torch layout
        b = np.asarray(bias, np.float32)
        r0, c0 = in_band * n, out_band * n
        slab[stage, r0:r0 + n, c0:c0 + n] = w.T
        slab[stage, n4, c0:c0 + n] = b

    # bands: 0 = a, 1 = b, 2 = c, 3 = d
    put(0, 0, 1, "ab")
    put(0, 0, 2, "ac")
    put(0, 0, 3, "ad")
    put(1, 1, 2, "bc")
    put(1, 1, 3, "bd")
    put(2, 2, 3, "cd")
    return jnp.asarray(slab)


def posterior_transition_machine(a_post, b_priors, c_priors, d_priors, wb_slab):
    """Forward pass. Returns (B, 4*N) = concat([a, b_post, c_post, d_post], 1),
    matching the PyTorch module. Callers that already hold the lane-packed
    (B, 4N) input [a | bp | cp | dp] can call the pallas_call directly and skip
    the concatenate."""
    b_dim, n = a_post.shape
    x_in = jnp.concatenate((a_post, b_priors, c_priors, d_priors), axis=1)
    vmem = pl.BlockSpec(memory_space=pltpu.MemorySpace.VMEM)
    return pl.pallas_call(
        _ptm_kernel,
        out_shape=jax.ShapeDtypeStruct((b_dim, 4 * n), jnp.float32),
        in_specs=[vmem, vmem],
        out_specs=vmem,
    )(x_in, wb_slab)


def _reference(a, bp, cp, dp, params):
    def lin(x, name):
        w, bias = params[name]
        return x @ jnp.asarray(w, jnp.float32).T + jnp.asarray(bias, jnp.float32)

    b = lin(a, "ab") * bp
    b = b / jnp.sum(b)
    c = lin(a, "ac") * lin(b, "bc") * cp
    c = c / jnp.sum(c)
    d = lin(a, "ad") * lin(b, "bd") * lin(c, "cd") * dp
    d = d / jnp.sum(d)
    return jnp.concatenate((a, b, c, d), axis=1)


if __name__ == "__main__":
    B, N = 2, 3  # batch=2, n_states=3 (module default)
    key = jax.random.PRNGKey(0)
    keys = jax.random.split(key, 17)

    # deterministic "posterior"/"prior" inputs (positive, like probabilities)
    a_post = jax.nn.softmax(jax.random.normal(keys[0], (B, N)), axis=-1)
    b_priors = jax.nn.softmax(jax.random.normal(keys[1], (B, N)), axis=-1)
    c_priors = jax.nn.softmax(jax.random.normal(keys[2], (B, N)), axis=-1)
    d_priors = jax.nn.softmax(jax.random.normal(keys[3], (B, N)), axis=-1)

    # deterministic parameter init for the 6 nn.Linear(n_states, n_states)
    params = {}
    bound = 1.0 / np.sqrt(N)
    for i, name in enumerate(("ab", "ac", "ad", "bc", "bd", "cd")):
        wk, bk = keys[4 + 2 * i], keys[5 + 2 * i]
        W = jax.random.uniform(wk, (N, N), jnp.float32, -bound, bound)
        bias = jax.random.uniform(bk, (N,), jnp.float32, -bound, bound)
        params[name] = (W, bias)

    # pack once at "init" time (per-model, not per-call, cost)
    wb_slab = pack_params(params, N)

    out = posterior_transition_machine(a_post, b_priors, c_priors, d_priors,
                                       wb_slab)
    out = jax.block_until_ready(out)

    ref = _reference(a_post.astype(jnp.float32), b_priors, c_priors, d_priors,
                     params)
    np.testing.assert_allclose(np.asarray(out), np.asarray(ref),
                               rtol=1e-5, atol=1e-5)

    print("KERNEL_OK")
</pallas_src>

<mosaic_0001>
module attributes {stable_mosaic.version = 11 : i64} {
  func.func @_ptm_kernel(%arg0: memref<2x12xf32, #tpu.memory_space<vmem>>, %arg1: memref<3x13x12xf32, #tpu.memory_space<vmem>>, %arg2: memref<2x12xf32, #tpu.memory_space<vmem>>) attributes {dimension_semantics = [], scalar_prefetch = 0 : i64, scratch_operands = 0 : i64, tpu.core_type = #tpu.core_type<tc>} {
    %c0 = arith.constant 0 : index
    %c0_0 = arith.constant 0 : index
    %0 = vector.load %arg0[%c0, %c0_0] : memref<2x12xf32, #tpu.memory_space<vmem>>, vector<2x12xf32>
    %c0_1 = arith.constant 0 : index
    %c0_2 = arith.constant 0 : index
    %c0_3 = arith.constant 0 : index
    %1 = vector.load %arg1[%c0_1, %c0_2, %c0_3] : memref<3x13x12xf32, #tpu.memory_space<vmem>>, vector<1x13x12xf32>
    %2 = vector.shape_cast %1 : vector<1x13x12xf32> to vector<13x12xf32>
    %3 = vector.extract_strided_slice %2 {offsets = [0, 0], sizes = [12, 12], strides = [1, 1]} : vector<13x12xf32> to vector<12x12xf32>
    %cst = arith.constant dense<0.000000e+00> : vector<2x12xf32>
    %4 = tpu.matmul %0, %3, %cst {dimension_numbers = #tpu.dot_dimension_numbers<[1], [0], [0], [1], [0, 0, 1, 1], [], []>} : vector<2x12xf32>, vector<12x12xf32>, vector<2x12xf32> -> vector<2x12xf32>
    %5 = vector.extract_strided_slice %2 {offsets = [12, 0], sizes = [1, 12], strides = [1, 1]} : vector<13x12xf32> to vector<1x12xf32>
    %6 = vector.broadcast %5 : vector<1x12xf32> to vector<2x12xf32>
    %7 = arith.addf %4, %6 : vector<2x12xf32>
    %8 = arith.mulf %7, %0 : vector<2x12xf32>
    %9 = vector.extract_strided_slice %8 {offsets = [0, 3], sizes = [2, 3], strides = [1, 1]} : vector<2x12xf32> to vector<2x3xf32>
    %10 = vector.shape_cast %9 : vector<2x3xf32> to vector<1x2x3xf32>
    %cst_4 = arith.constant dense<0.000000e+00> : vector<1xf32>
    %11 = vector.multi_reduction <add>, %10, %cst_4 [1, 2] : vector<1x2x3xf32> to vector<1xf32>
    %12 = vector.shape_cast %11 : vector<1xf32> to vector<1x1x1xf32>
    %13 = vector.extract %12[0, 0, 0] : f32 from vector<1x1x1xf32>
    %cst_5 = arith.constant 1.000000e+00 : f32
    %14 = arith.divf %cst_5, %13 : f32
    %15 = vector.broadcast %14 : f32 to vector<2x12xf32>
    %16 = arith.mulf %8, %15 : vector<2x12xf32>
    %c1 = arith.constant 1 : index
    %c0_6 = arith.constant 0 : index
    %c0_7 = arith.constant 0 : index
    %17 = vector.load %arg1[%c1, %c0_6, %c0_7] : memref<3x13x12xf32, #tpu.memory_space<vmem>>, vector<1x13x12xf32>
    %18 = vector.shape_cast %17 : vector<1x13x12xf32> to vector<13x12xf32>
    %19 = vector.extract_strided_slice %18 {offsets = [0, 0], sizes = [12, 12], strides = [1, 1]} : vector<13x12xf32> to vector<12x12xf32>
    %cst_8 = arith.constant dense<0.000000e+00> : vector<2x12xf32>
    %20 = tpu.matmul %16, %19, %cst_8 {dimension_numbers = #tpu.dot_dimension_numbers<[1], [0], [0], [1], [0, 0, 1, 1], [], []>} : vector<2x12xf32>, vector<12x12xf32>, vector<2x12xf32> -> vector<2x12xf32>
    %21 = vector.extract_strided_slice %18 {offsets = [12, 0], sizes = [1, 12], strides = [1, 1]} : vector<13x12xf32> to vector<1x12xf32>
    %22 = vector.broadcast %21 : vector<1x12xf32> to vector<2x12xf32>
    %23 = arith.addf %20, %22 : vector<2x12xf32>
    %24 = arith.mulf %23, %8 : vector<2x12xf32>
    %25 = vector.extract_strided_slice %24 {offsets = [0, 6], sizes = [2, 3], strides = [1, 1]} : vector<2x12xf32> to vector<2x3xf32>
    %26 = vector.shape_cast %25 : vector<2x3xf32> to vector<1x2x3xf32>
    %cst_9 = arith.constant dense<0.000000e+00> : vector<1xf32>
    %27 = vector.multi_reduction <add>, %26, %cst_9 [1, 2] : vector<1x2x3xf32> to vector<1xf32>
    %28 = vector.shape_cast %27 : vector<1xf32> to vector<1x1x1xf32>
    %29 = vector.extract %28[0, 0, 0] : f32 from vector<1x1x1xf32>
    %cst_10 = arith.constant 1.000000e+00 : f32
    %30 = arith.divf %cst_10, %29 : f32
    %31 = vector.broadcast %30 : f32 to vector<2x12xf32>
    %32 = arith.mulf %24, %31 : vector<2x12xf32>
    %c2 = arith.constant 2 : index
    %c0_11 = arith.constant 0 : index
    %c0_12 = arith.constant 0 : index
    %33 = vector.load %arg1[%c2, %c0_11, %c0_12] : memref<3x13x12xf32, #tpu.memory_space<vmem>>, vector<1x13x12xf32>
    %34 = vector.shape_cast %33 : vector<1x13x12xf32> to vector<13x12xf32>
    %35 = vector.extract_strided_slice %34 {offsets = [0, 0], sizes = [12, 12], strides = [1, 1]} : vector<13x12xf32> to vector<12x12xf32>
    %cst_13 = arith.constant dense<0.000000e+00> : vector<2x12xf32>
    %36 = tpu.matmul %32, %35, %cst_13 {dimension_numbers = #tpu.dot_dimension_numbers<[1], [0], [0], [1], [0, 0, 1, 1], [], []>} : vector<2x12xf32>, vector<12x12xf32>, vector<2x12xf32> -> vector<2x12xf32>
    %37 = vector.extract_strided_slice %34 {offsets = [12, 0], sizes = [1, 12], strides = [1, 1]} : vector<13x12xf32> to vector<1x12xf32>
    %38 = vector.broadcast %37 : vector<1x12xf32> to vector<2x12xf32>
    %39 = arith.addf %36, %38 : vector<2x12xf32>
    %40 = arith.mulf %39, %24 : vector<2x12xf32>
    %41 = vector.extract_strided_slice %40 {offsets = [0, 9], sizes = [2, 3], strides = [1, 1]} : vector<2x12xf32> to vector<2x3xf32>
    %42 = vector.shape_cast %41 : vector<2x3xf32> to vector<1x2x3xf32>
    %cst_14 = arith.constant dense<0.000000e+00> : vector<1xf32>
    %43 = vector.multi_reduction <add>, %42, %cst_14 [1, 2] : vector<1x2x3xf32> to vector<1xf32>
    %44 = vector.shape_cast %43 : vector<1xf32> to vector<1x1x1xf32>
    %45 = vector.extract %44[0, 0, 0] : f32 from vector<1x1x1xf32>
    %cst_15 = arith.constant 1.000000e+00 : f32
    %46 = arith.divf %cst_15, %45 : f32
    %47 = vector.extract_strided_slice %0 {offsets = [0, 0], sizes = [2, 3], strides = [1, 1]} : vector<2x12xf32> to vector<2x3xf32>
    %c0_16 = arith.constant 0 : index
    %c0_17 = arith.constant 0 : index
    %48 = vector.load %arg2[%c0_16, %c0_17] : memref<2x12xf32, #tpu.memory_space<vmem>>, vector<2x3xf32>
    tpu.vector_store %arg2[%c0_16, %c0_17], %47 {strides = array<i32>} : memref<2x12xf32, #tpu.memory_space<vmem>>, vector<2x3xf32>,
    %49 = vector.extract_strided_slice %8 {offsets = [0, 3], sizes = [2, 3], strides = [1, 1]} : vector<2x12xf32> to vector<2x3xf32>
    %50 = vector.broadcast %14 : f32 to vector<2x3xf32>
    %51 = arith.mulf %49, %50 : vector<2x3xf32>
    %c0_18 = arith.constant 0 : index
    %c3 = arith.constant 3 : index
    %52 = vector.load %arg2[%c0_18, %c3] : memref<2x12xf32, #tpu.memory_space<vmem>>, vector<2x3xf32>
    tpu.vector_store %arg2[%c0_18, %c3], %51 {strides = array<i32>} : memref<2x12xf32, #tpu.memory_space<vmem>>, vector<2x3xf32>,
    %53 = vector.extract_strided_slice %24 {offsets = [0, 6], sizes = [2, 3], strides = [1, 1]} : vector<2x12xf32> to vector<2x3xf32>
    %54 = vector.broadcast %30 : f32 to vector<2x3xf32>
    %55 = arith.mulf %53, %54 : vector<2x3xf32>
    %c0_19 = arith.constant 0 : index
    %c6 = arith.constant 6 : index
    %56 = vector.load %arg2[%c0_19, %c6] : memref<2x12xf32, #tpu.memory_space<vmem>>, vector<2x3xf32>
    tpu.vector_store %arg2[%c0_19, %c6], %55 {strides = array<i32>} : memref<2x12xf32, #tpu.memory_space<vmem>>, vector<2x3xf32>,
    %57 = vector.extract_strided_slice %40 {offsets = [0, 9], sizes = [2, 3], strides = [1, 1]} : vector<2x12xf32> to vector<2x3xf32>
    %58 = vector.broadcast %46 : f32 to vector<2x3xf32>
    %59 = arith.mulf %57, %58 : vector<2x3xf32>
    %c0_20 = arith.constant 0 : index
    %c9 = arith.constant 9 : index
    %60 = vector.load %arg2[%c0_20, %c9] : memref<2x12xf32, #tpu.memory_space<vmem>>, vector<2x3xf32>
    tpu.vector_store %arg2[%c0_20, %c9], %59 {strides = array<i32>} : memref<2x12xf32, #tpu.memory_space<vmem>>, vector<2x3xf32>,
    return
  }
}

</mosaic_0001>

<llo_original>
// kernel: tpu_custom_call.1
$region0: #{tpu_custom_call.1}
  #allocation0 [shape = 'u32[]', space=smem, size = 0x4, offset = 0x4, fixed_abs, tag = 'smem constant byte address 0x4 - core index']
  #allocation1 [shape = 'u32[144,128]{1,0:T(1,128)}', space=vmem, size = 0x12000, scoped, tag = 'internal scratch']
  %s0 = inlined_call_operand.hbm [shape: f32[2,12], index: 0, kind: input, shape index: {}]
  %s1 = inlined_call_operand.hbm [shape: f32[3,13,12], index: 1, kind: input, shape index: {}]
  %s2 = inlined_call_operand.hbm [shape: f32[2,12], index: 2, kind: output, shape index: {}]
  %s3 = sld [smem:[#allocation0]]
  $region26: #{tpu_custom_call.1} parent=0
    _
  %s5 = ssub.s32 1, %s3
  %s6 = scalar_select 0, %s5, %s3
  $region1: #{tpu_custom_call.1} parent=0
    #allocation2 [shape = 'u8[1024]{0}', space=vmem, size = 0x400, scoped, tag = 'input window, operand 0, single buffered']
    #allocation3 [shape = 's32[1]{0}', space=sflag, size = 0x4, scoped, tag = 'scoped memory for tpu_custom_call.1']
    #allocation4 [shape = 's32[1]{0}', space=sflag, size = 0x4, scoped, tag = 'scoped memory for tpu_custom_call.1']
    #allocation5 [shape = 'u8[24576]{0}', space=vmem, size = 0x6000, scoped, tag = 'input window, operand 1, single buffered']
    #allocation6 [shape = 's32[1]{0}', space=sflag, size = 0x4, scoped, tag = 'scoped memory for tpu_custom_call.1']
    #allocation7 [shape = 'u8[1024]{0}', space=vmem, size = 0x400, scoped, tag = 'output window, operand 0, single buffered']
    %7 = vsyncpa [#allocation3], 0
    %8 = vsyncpa [#allocation6], 0
    %9 = vsyncpa [#allocation4], 0
    // Predicated region
    $region2: #{tpu_custom_call.1} parent=1 // pred_check
      _
    $region3: #{tpu_custom_call.1} parent=1 // pred_check_branch
      %11 = sbr.rel (0) target = $region5
    $region4: #{tpu_custom_call.1} parent=1 // pred_region
      %s13 = ssub.s32 32, 32
      %14 = vsyncadd [#allocation3], %s13
      %s16 = sshll.u32 [#allocation2], 4
      %s17 = int_to_ptr.vmem [resolvable:$true] %s16
      %19 = dma.hbm_to_vmem [thread:$0]  %s0, 32, %s17, [#allocation3]
    $region5: #{tpu_custom_call.1} parent=1 // pred_fallthru
      _
    // Predicated region
    $region6: #{tpu_custom_call.1} parent=1 // pred_check
      _
    $region7: #{tpu_custom_call.1} parent=1 // pred_check_branch
      %21 = sbr.rel (0) target = $region9
    $region8: #{tpu_custom_call.1} parent=1 // pred_region
      %s23 = ssub.s32 768, 768
      %24 = vsyncadd [#allocation6], %s23
      %s25 = sshll.u32 [#allocation5], 4
      %s26 = int_to_ptr.vmem [resolvable:$true] %s25
      %31 = dma.hbm_to_vmem [thread:$0]  %s1, 768, %s26, [#allocation6], 128, 128, 8
    $region9: #{tpu_custom_call.1} parent=1 // pred_fallthru
      _
    // Predicated region
    $region10: #{tpu_custom_call.1} parent=1 // pred_check
      _
    $region11: #{tpu_custom_call.1} parent=1 // pred_check_branch
      %33 = sbr.rel (0) target = $region13
    $region12: #{tpu_custom_call.1} parent=1 // pred_region
      %34 = dma.done [#allocation3], 32
    $region13: #{tpu_custom_call.1} parent=1 // pred_fallthru
      _
    // Predicated region
    $region14: #{tpu_custom_call.1} parent=1 // pred_check
      _
    $region15: #{tpu_custom_call.1} parent=1 // pred_check_branch
      %36 = sbr.rel (0) target = $region17
    $region16: #{tpu_custom_call.1} parent=1 // pred_region
      %37 = dma.done [#allocation6], 768
    $region17: #{tpu_custom_call.1} parent=1 // pred_fallthru
      _
    %v38 = vld [vmem:[#allocation2] sm:$0x3]
    %v39 = vld [vmem:[#allocation5] sm:$0xff]
    %v40 = vld [vmem:[#allocation5 + $0x8] sm:$0x1f]
    %v41 = vlaneseq
    %v42 = vshrl.u32 %v41, 7
    %v43 = vsub.s32 4, %v42
    %v44 = vrot.slane %v40, %v43
    %vm45 = vcmask 97280
    %v47 = vsel %vm45, %v38, 0
    %vm49 = vcmask 1043456
    %v51 = vsel %vm49, %v40, 0
    %53 = vmatprep.subr.mxu0 0.0
    %54 = vmatpush1.msra.mxu0 %v39
    %55 = vmatprep.subr.mxu0 0.0
    %56 = vmatpush1.msra.mxu0 %v51
    %57 = vmatprep.subr.mxu0 0.0
    %58 = vmatpush1.msra.mxu0 0.0
    %59 = vmatprep.subr.mxu0 0.0
    %60 = vmatpush1.msra.mxu0 0.0
    %61 = vmatprep.subr.mxu0 0.0
    %62 = vmatpush1.msra.mxu0 0.0
    %63 = vmatprep.subr.mxu0 0.0
    %64 = vmatpush1.msra.mxu0 0.0
    %65 = vmatprep.subr.mxu0 0.0
    %66 = vmatpush1.msra.mxu0 0.0
    %67 = vmatprep.subr.mxu0 0.0
    %68 = vmatpush1.msra.mxu0 0.0
    %69 = vmatprep.subr.mxu0 0.0
    %70 = vmatpush1.msra.mxu0 0.0
    %71 = vmatprep.subr.mxu0 0.0
    %72 = vmatpush1.msra.mxu0 0.0
    %73 = vmatprep.subr.mxu0 0.0
    %74 = vmatpush1.msra.mxu0 0.0
    %75 = vmatprep.subr.mxu0 0.0
    %76 = vmatpush1.msra.mxu0 0.0
    %77 = vmatprep.subr.mxu0 0.0
    %78 = vmatpush1.msra.mxu0 0.0
    %79 = vmatprep.subr.mxu0 0.0
    %80 = vmatpush1.msra.mxu0 0.0
    %81 = vmatprep.subr.mxu0 0.0
    %82 = vmatpush1.msra.mxu0 0.0
    %83 = vmatprep.subr.mxu0 0.0
    %84 = vmatpush1.msra.mxu0 0.0
    %85 = vmatprep.subr.mxu0 0.0
    %86 = vmatpush1.msra.mxu0 0.0
    %87 = vmatprep.subr.mxu0 0.0
    %88 = vmatpush1.msra.mxu0 0.0
    %89 = vmatprep.subr.mxu0 0.0
    %90 = vmatpush1.msra.mxu0 0.0
    %91 = vmatprep.subr.mxu0 0.0
    %92 = vmatpush1.msra.mxu0 0.0
    %93 = vmatprep.subr.mxu0 0.0
    %94 = vmatpush1.msra.mxu0 0.0
    %95 = vmatprep.subr.mxu0 0.0
    %96 = vmatpush1.msra.mxu0 0.0
    %97 = vmatprep.subr.mxu0 0.0
    %98 = vmatpush1.msra.mxu0 0.0
    %99 = vmatprep.subr.mxu0 0.0
    %100 = vmatpush1.msra.mxu0 0.0
    %101 = vmatprep.subr.mxu0 0.0
    %102 = vmatpush1.msra.mxu0 0.0
    %103 = vmatprep.subr.mxu0 0.0
    %104 = vmatpush1.msra.mxu0 0.0
    %105 = vmatprep.subr.mxu0 0.0
    %106 = vmatpush1.msra.mxu0 0.0
    %107 = vmatprep.subr.mxu0 0.0
    %108 = vmatpush1.msra.mxu0 0.0
    %109 = vmatprep.subr.mxu0 0.0
    %110 = vmatpush1.msra.mxu0 0.0
    %111 = vmatprep.subr.mxu0 0.0
    %112 = vmatpush1.msra.mxu0 0.0
    %113 = vmatprep.subr.mxu0 0.0
    %114 = vmatpush1.msra.mxu0 0.0
    %115 = vmatprep.subr.mxu0 0.0
    %116 = vmatpush1.msra.mxu0 0.0
    %117 = vmatprep.mubr.f32.mxu0 0.0
    %118 = vmatmul.mubr.f32.gmra.mrb[0].mxu0 %v47
    %v119 = vpop.f32.mrb[0].mxu0
    %v120 = vadd.f32 %v44, %v119
    %v121 = vpop.f32.mrb[0].mxu0
    %122 = vdwg.mxu0
    %v123 = vmul.f32 %v120, %v38
    %125 = vrot.lane.b32.xlu0 %v123, 125
    %v126 = vpop.permute.xlu0 %125
    %vm128 = vcmask 17408
    %v129 = vsel %vm128, %v126, 0.0
    %130 = vadd.xlane.f32.xlu0 %v129
    %v131 = vpop.xlane.xlu0 %130
    %v132 = vrot.slane %v131, 4
    %v133 = vadd.f32 %v131, %v132
    %v134 = vrot.slane %v133, 2
    %v135 = vadd.f32 %v133, %v134
    %v136 = vrot.slane %v135, 1
    %v137 = vadd.f32 %v135, %v136
    %s138 = vtos %v137
    %v139 = vstv %s138
    %v140 = vrcp.pop %v139
    %s141 = vtos %v140
    %v142 = vstv %s141
    %v143 = vmul.f32 %v123, %v142
    %s144 = scalar_lea.vmem [#allocation5], 16
    %v145 = vld [vmem:[%s144] sm:$0xff]
    %v146 = vld [vmem:[%s144 + $0x8] sm:$0x1f]
    %v147 = vlaneseq
    %v148 = vshrl.u32 %v147, 7
    %v149 = vsub.s32 4, %v148
    %v150 = vrot.slane %v146, %v149
    %v152 = vsel %vm45, %v143, 0
    %v155 = vsel %vm49, %v146, 0
    %157 = vmatprep.subr.mxu0 0.0
    %158 = vmatpush1.msra.mxu0 %v145
    %159 = vmatprep.subr.mxu0 0.0
    %160 = vmatpush1.msra.mxu0 %v155
    %161 = vmatprep.subr.mxu0 0.0
    %162 = vmatpush1.msra.mxu0 0.0
    %163 = vmatprep.subr.mxu0 0.0
    %164 = vmatpush1.msra.mxu0 0.0
    %165 = vmatprep.subr.mxu0 0.0
    %166 = vmatpush1.msra.mxu0 0.0
    %167 = vmatprep.subr.mxu0 0.0
    %168 = vmatpush1.msra.mxu0 0.0
    %169 = vmatprep.subr.mxu0 0.0
    %170 = vmatpush1.msra.mxu0 0.0
    %171 = vmatprep.subr.mxu0 0.0
    %172 = vmatpush1.msra.mxu0 0.0
    %173 = vmatprep.subr.mxu0 0.0
    %174 = vmatpush1.msra.mxu0 0.0
    %175 = vmatprep.subr.mxu0 0.0
    %176 = vmatpush1.msra.mxu0 0.0
    %177 = vmatprep.subr.mxu0 0.0
    %178 = vmatpush1.msra.mxu0 0.0
    %179 = vmatprep.subr.mxu0 0.0
    %180 = vmatpush1.msra.mxu0 0.0
    %181 = vmatprep.subr.mxu0 0.0
    %182 = vmatpush1.msra.mxu0 0.0
    %183 = vmatprep.subr.mxu0 0.0
    %184 = vmatpush1.msra.mxu0 0.0
    %185 = vmatprep.subr.mxu0 0.0
    %186 = vmatpush1.msra.mxu0 0.0
    %187 = vmatprep.subr.mxu0 0.0
    %188 = vmatpush1.msra.mxu0 0.0
    %189 = vmatprep.subr.mxu0 0.0
    %190 = vmatpush1.msra.mxu0 0.0
    %191 = vmatprep.subr.mxu0 0.0
    %192 = vmatpush1.msra.mxu0 0.0
    %193 = vmatprep.subr.mxu0 0.0
    %194 = vmatpush1.msra.mxu0 0.0
    %195 = vmatprep.subr.mxu0 0.0
    %196 = vmatpush1.msra.mxu0 0.0
    %197 = vmatprep.subr.mxu0 0.0
    %198 = vmatpush1.msra.mxu0 0.0
    %199 = vmatprep.subr.mxu0 0.0
    %200 = vmatpush1.msra.mxu0 0.0
    %201 = vmatprep.subr.mxu0 0.0
    %202 = vmatpush1.msra.mxu0 0.0
    %203 = vmatprep.subr.mxu0 0.0
    %204 = vmatpush1.msra.mxu0 0.0
    %205 = vmatprep.subr.mxu0 0.0
    %206 = vmatpush1.msra.mxu0 0.0
    %207 = vmatprep.subr.mxu0 0.0
    %208 = vmatpush1.msra.mxu0 0.0
    %209 = vmatprep.subr.mxu0 0.0
    %210 = vmatpush1.msra.mxu0 0.0
    %211 = vmatprep.subr.mxu0 0.0
    %212 = vmatpush1.msra.mxu0 0.0
    %213 = vmatprep.subr.mxu0 0.0
    %214 = vmatpush1.msra.mxu0 0.0
    %215 = vmatprep.subr.mxu0 0.0
    %216 = vmatpush1.msra.mxu0 0.0
    %217 = vmatprep.subr.mxu0 0.0
    %218 = vmatpush1.msra.mxu0 0.0
    %219 = vmatprep.subr.mxu0 0.0
    %220 = vmatpush1.msra.mxu0 0.0
    %221 = vmatprep.mubr.f32.mxu0 0.0
    %222 = vmatmul.mubr.f32.gmra.mrb[0].mxu0 %v152
    %v223 = vpop.f32.mrb[0].mxu0
    %v224 = vadd.f32 %v150, %v223
    %v225 = vpop.f32.mrb[0].mxu0
    %226 = vdwg.mxu0
    %v227 = vmul.f32 %v224, %v123
    %229 = vrot.lane.b32.xlu0 %v227, 122
    %v230 = vpop.permute.xlu0 %229
    %v232 = vsel %vm128, %v230, 0.0
    %233 = vadd.xlane.f32.xlu0 %v232
    %v234 = vpop.xlane.xlu0 %233
    %v235 = vrot.slane %v234, 4
    %v236 = vadd.f32 %v234, %v235
    %v237 = vrot.slane %v236, 2
    %v238 = vadd.f32 %v236, %v237
    %v239 = vrot.slane %v238, 1
    %v240 = vadd.f32 %v238, %v239
    %s241 = vtos %v240
    %v242 = vstv %s241
    %v243 = vrcp.pop %v242
    %s244 = vtos %v243
    %v245 = vstv %s244
    %v246 = vmul.f32 %v227, %v245
    %s247 = scalar_lea.vmem [#allocation5], 32
    %v248 = vld [vmem:[%s247] sm:$0xff]
    %v249 = vld [vmem:[%s247 + $0x8] sm:$0x1f]
    %v250 = vlaneseq
    %v251 = vshrl.u32 %v250, 7
    %v252 = vsub.s32 4, %v251
    %v253 = vrot.slane %v249, %v252
    %v255 = vsel %vm45, %v246, 0
    %v258 = vsel %vm49, %v249, 0
    %260 = vmatprep.subr.mxu0 0.0
    %261 = vmatpush1.msra.mxu0 %v248
    %262 = vmatprep.subr.mxu0 0.0
    %263 = vmatpush1.msra.mxu0 %v258
    %264 = vmatprep.subr.mxu0 0.0
    %265 = vmatpush1.msra.mxu0 0.0
    %266 = vmatprep.subr.mxu0 0.0
    %267 = vmatpush1.msra.mxu0 0.0
    %268 = vmatprep.subr.mxu0 0.0
    %269 = vmatpush1.msra.mxu0 0.0
    %270 = vmatprep.subr.mxu0 0.0
    %271 = vmatpush1.msra.mxu0 0.0
    %272 = vmatprep.subr.mxu0 0.0
    %273 = vmatpush1.msra.mxu0 0.0
    %274 = vmatprep.subr.mxu0 0.0
    %275 = vmatpush1.msra.mxu0 0.0
    %276 = vmatprep.subr.mxu0 0.0
    %277 = vmatpush1.msra.mxu0 0.0
    %278 = vmatprep.subr.mxu0 0.0
    %279 = vmatpush1.msra.mxu0 0.0
    %280 = vmatprep.subr.mxu0 0.0
    %281 = vmatpush1.msra.mxu0 0.0
    %282 = vmatprep.subr.mxu0 0.0
    %283 = vmatpush1.msra.mxu0 0.0
    %284 = vmatprep.subr.mxu0 0.0
    %285 = vmatpush1.msra.mxu0 0.0
    %286 = vmatprep.subr.mxu0 0.0
    %287 = vmatpush1.msra.mxu0 0.0
    %288 = vmatprep.subr.mxu0 0.0
    %289 = vmatpush1.msra.mxu0 0.0
    %290 = vmatprep.subr.mxu0 0.0
    %291 = vmatpush1.msra.mxu0 0.0
    %292 = vmatprep.subr.mxu0 0.0
    %293 = vmatpush1.msra.mxu0 0.0
    %294 = vmatprep.subr.mxu0 0.0
    %295 = vmatpush1.msra.mxu0 0.0
    %296 = vmatprep.subr.mxu0 0.0
    %297 = vmatpush1.msra.mxu0 0.0
    %298 = vmatprep.subr.mxu0 0.0
    %299 = vmatpush1.msra.mxu0 0.0
    %300 = vmatprep.subr.mxu0 0.0
    %301 = vmatpush1.msra.mxu0 0.0
    %302 = vmatprep.subr.mxu0 0.0
    %303 = vmatpush1.msra.mxu0 0.0
    %304 = vmatprep.subr.mxu0 0.0
    %305 = vmatpush1.msra.mxu0 0.0
    %306 = vmatprep.subr.mxu0 0.0
    %307 = vmatpush1.msra.mxu0 0.0
    %308 = vmatprep.subr.mxu0 0.0
    %309 = vmatpush1.msra.mxu0 0.0
    %310 = vmatprep.subr.mxu0 0.0
    %311 = vmatpush1.msra.mxu0 0.0
    %312 = vmatprep.subr.mxu0 0.0
    %313 = vmatpush1.msra.mxu0 0.0
    %314 = vmatprep.subr.mxu0 0.0
    %315 = vmatpush1.msra.mxu0 0.0
    %316 = vmatprep.subr.mxu0 0.0
    %317 = vmatpush1.msra.mxu0 0.0
    %318 = vmatprep.subr.mxu0 0.0
    %319 = vmatpush1.msra.mxu0 0.0
    %320 = vmatprep.subr.mxu0 0.0
    %321 = vmatpush1.msra.mxu0 0.0
    %322 = vmatprep.subr.mxu0 0.0
    %323 = vmatpush1.msra.mxu0 0.0
    %324 = vmatprep.mubr.f32.mxu0 0.0
    %325 = vmatmul.mubr.f32.gmra.mrb[0].mxu0 %v255
    %v326 = vpop.f32.mrb[0].mxu0
    %v327 = vadd.f32 %v253, %v326
    %v328 = vpop.f32.mrb[0].mxu0
    %329 = vdwg.mxu0
    %v330 = vmul.f32 %v327, %v227
    %332 = vrot.lane.b32.xlu0 %v330, 119
    %v333 = vpop.permute.xlu0 %332
    %v335 = vsel %vm128, %v333, 0.0
    %336 = vadd.xlane.f32.xlu0 %v335
    %v337 = vpop.xlane.xlu0 %336
    %v338 = vrot.slane %v337, 4
    %v339 = vadd.f32 %v337, %v338
    %v340 = vrot.slane %v339, 2
    %v341 = vadd.f32 %v339, %v340
    %v342 = vrot.slane %v341, 1
    %v343 = vadd.f32 %v341, %v342
    %s344 = vtos %v343
    %v345 = vstv %s344
    %v346 = vrcp.pop %v345
    %s347 = vtos %v346
    %348 = vst.msk [vmem:[#allocation7] sm:$0x3] %vm128, %v38
    %vm349 = vcmask 42008
    %350 = vst.msk [vmem:[#allocation7] sm:$0x3] %vm349, %v143
    %vm351 = vcmask 66608
    %352 = vst.msk [vmem:[#allocation7] sm:$0x3] %vm351, %v246
    %v353 = vstv %s347
    %v354 = vmul.f32 %v330, %v353
    %vm355 = vcmask 91208
    %356 = vst.msk [vmem:[#allocation7] sm:$0x3] %vm355, %v354
    // Predicated region
    $region18: #{tpu_custom_call.1} parent=1 // pred_check
      _
    $region19: #{tpu_custom_call.1} parent=1 // pred_check_branch
      %358 = sbr.rel (0) target = $region21
    $region20: #{tpu_custom_call.1} parent=1 // pred_region
      %s360 = ssub.s32 32, 32
      %361 = vsyncadd [#allocation4], %s360
      %s363 = sshll.u32 [#allocation7], 4
      %s364 = int_to_ptr.vmem [resolvable:$true] %s363
      %366 = dma.vmem_to_hbm [thread:$0]  %s364, 32, %s2, [#allocation4]
    $region21: #{tpu_custom_call.1} parent=1 // pred_fallthru
      _
    // Predicated region
    $region22: #{tpu_custom_call.1} parent=1 // pred_check
      _
    $region23: #{tpu_custom_call.1} parent=1 // pred_check_branch
      %368 = sbr.rel (0) target = $region25
    $region24: #{tpu_custom_call.1} parent=1 // pred_region
      %369 = dma.done [#allocation4], 32
    $region25: #{tpu_custom_call.1} parent=1 // pred_fallthru
      _
    %370 = vsyncpa [#allocation3], 1
    %371 = vsyncpa [#allocation6], 1
    %372 = vsyncpa [#allocation4], 1

</llo_original>
